<compile_context>
chip_gen: v5e
topology: v5e:2x2
jax: 0.10.0
libtpu: 0.0.40
codegen_flags: <defaults>
</compile_context>

<pallas_src>
import jax
import jax.numpy as jnp
import numpy as np
from jax.experimental import pallas as pl
from jax.experimental.pallas import tpu as pltpu


def _round_up(x, m):
    return ((x + m - 1) // m) * m


def _multihot(idx, vocab_tile, dtype):
    """(TB, F) row ids -> (TB, vocab_tile) 0/1 matrix in `dtype`.

    OR-of-masks + single cast.  Assumes per-feature vocab ranges are disjoint
    (true for this module: offset = cumsum(nvec)), so OR == integer count.
    """
    tb, nfeat = idx.shape
    col = jax.lax.broadcasted_iota(jnp.int32, (tb, vocab_tile), 1)
    hit = idx[:, 0:1] == col
    for f in range(1, nfeat):          # F is small & static
        hit = hit | (idx[:, f : f + 1] == col)
    return hit.astype(dtype)


def _resident_kernel(idx_ref, table_ref, out_ref):
    # idx_ref: (TB, F) i32 global row ids; table_ref: (Vres, D) VMEM-resident
    multihot = _multihot(idx_ref[...], table_ref.shape[0], table_ref.dtype)
    out_ref[...] = jnp.dot(
        multihot, table_ref[...], preferred_element_type=jnp.float32
    ).astype(out_ref.dtype)


def _tiled_kernel(idx_ref, table_ref, out_ref, acc_ref):
    # idx_ref: (TB, F) i32; table_ref: (TV, D) vocab tile; acc_ref: (TB, D) f32
    k = pl.program_id(1)
    tile_v = table_ref.shape[0]

    @pl.when(k == 0)
    def _init():
        acc_ref[...] = jnp.zeros_like(acc_ref)

    # Shift the tiny (TB, F) block instead of adding k*tile_v to the full
    # (TB, TV) iota each step.  Padded-batch sentinel (vpad) stays safe:
    # vpad - k*tile_v >= tile_v > any column id for every k.
    idx_local = idx_ref[...] - k * tile_v
    multihot = _multihot(idx_local, tile_v, table_ref.dtype)
    acc_ref[...] += jnp.dot(
        multihot, table_ref[...], preferred_element_type=jnp.float32
    )

    @pl.when(k == pl.num_programs(1) - 1)
    def _finalize():
        out_ref[...] = acc_ref[...].astype(out_ref.dtype)


def _vmem_budget_bytes():
    phys = 64 * 1024 * 1024
    try:
        info = pltpu.get_tpu_info()
        phys = int(getattr(info, "vmem_capacity_bytes", phys))
    except Exception:
        pass
    # ~20% headroom for Mosaic internal scratch; never request more than
    # ~100 MiB (v5e/v6e: 128 MiB physical, v7x: 64 MiB physical).
    return min(int(phys * 0.8), 100 * 1024 * 1024)


def multi_embedding_bag(inputs, table, offset, *, tile_b=512, tile_v=512, mode="auto"):
    """Pallas TPU forward of MultiEmbeddingBag: embedding(offset + inputs).sum(-2).

    inputs: (..., F) int;  table: (sum(nvec), D) float (f32 or bf16);
    offset: (F,) int = F.pad(cumsum(nvec[:-1]), [1, 0]).
    mode: "auto" | "resident" | "tiled".
    """
    lead_shape = inputs.shape[:-1]
    nfeat = inputs.shape[-1]
    flat = inputs.reshape(-1, nfeat).astype(jnp.int32)
    batch = flat.shape[0]
    vocab, dim = table.shape
    isz = jnp.dtype(table.dtype).itemsize
    out_dtype = table.dtype

    # Fold per-feature offsets once (one fused (B, F) add in XLA); the kernel
    # then needs neither an offset operand nor a per-step add.
    gids = flat + offset.reshape(1, nfeat).astype(jnp.int32)

    vmem_budget = _vmem_budget_bytes()

    # ---- batch (MXU M-dim) tile -------------------------------------------
    bpad8 = _round_up(batch, 8)
    tile_b = _round_up(max(8, min(tile_b, bpad8)), 8)
    if tile_b == bpad8 and bpad8 >= 256:
        # Keep >= 2 batch tiles so the "parallel" axis can shard across v7x's 2 TCs.
        tile_b = _round_up((bpad8 + 1) // 2, 8)

    # ---- VMEM footprint models ---------------------------------------------
    def res_bytes(tb, v):
        return (
            2 * v * dim * isz          # resident table (pipeline double-buffers)
            + 2 * tb * nfeat * 4       # index tile
            + 2 * tb * dim * isz       # output tile
            + tb * v * (isz + 5)       # multihot + bool mask + iota transients
            + tb * dim * 4             # f32 matmul result
        )

    def tiled_bytes(tb, tv):
        return (
            2 * tv * dim * isz         # table tile, double-buffered
            + 2 * tb * nfeat * 4
            + 2 * tb * dim * isz
            + tb * dim * 4             # f32 accumulator scratch
            + tb * tv * (isz + 5)      # transients
            + tb * dim * 4
        )

    use_resident = (mode == "resident") or (
        mode == "auto" and res_bytes(tile_b, _round_up(vocab, 8)) <= vmem_budget // 2
    )
    if mode == "tiled":
        use_resident = False

    bpad = _round_up(batch, tile_b)

    if use_resident:
        # Small-vocab fast path: whole table VMEM-resident, single grid axis,
        # no accumulator scratch, no init/finalize phases, table DMA'd once.
        vres = _round_up(vocab, 8)
        table_r = jnp.pad(table, ((0, vres - vocab), (0, 0))) if vres != vocab else table
        sentinel = vres                   # matches no column (cols are < vres)
        gids_p = jnp.pad(gids, ((0, bpad - batch), (0, 0)), constant_values=sentinel)
        est = res_bytes(tile_b, vres)
        vmem_limit = int(min(max(int(1.5 * est), 32 * 1024 * 1024), vmem_budget))
        out = pl.pallas_call(
            _resident_kernel,
            out_shape=jax.ShapeDtypeStruct((bpad, dim), out_dtype),
            grid_spec=pltpu.PrefetchScalarGridSpec(
                num_scalar_prefetch=0,
                grid=(bpad // tile_b,),
                in_specs=[
                    pl.BlockSpec((tile_b, nfeat), lambda i: (i, 0)),   # indices
                    pl.BlockSpec((vres, dim), lambda i: (0, 0)),       # resident table
                ],
                out_specs=pl.BlockSpec((tile_b, dim), lambda i: (i, 0)),
            ),
            compiler_params=pltpu.CompilerParams(
                dimension_semantics=("parallel",),
                vmem_limit_bytes=vmem_limit,
            ),
        )(gids_p, table_r)
    else:
        # Vocab-tiled path: accumulate multihot @ table_tile over vocab tiles.
        tile_v = _round_up(max(8, min(tile_v, _round_up(vocab, 128))), 128)
        while tiled_bytes(tile_b, tile_v) > vmem_budget and tile_v > 128:
            tile_v = max(128, _round_up(tile_v // 2, 8))
        while tiled_bytes(tile_b, tile_v) > vmem_budget and tile_b > 64:
            tile_b = max(64, _round_up(tile_b // 2, 8))
            bpad = _round_up(batch, tile_b)
        vpad = _round_up(vocab, tile_v)
        # In a real module this vocab-only pad (no D pad!) is hoisted to __init__.
        table_p = jnp.pad(table, ((0, vpad - vocab), (0, 0)))
        sentinel = vpad                   # vpad - k*tile_v >= tile_v for all k
        gids_p = jnp.pad(gids, ((0, bpad - batch), (0, 0)), constant_values=sentinel)
        est = tiled_bytes(tile_b, tile_v)
        vmem_limit = int(min(max(int(1.5 * est), 32 * 1024 * 1024), vmem_budget))
        out = pl.pallas_call(
            _tiled_kernel,
            out_shape=jax.ShapeDtypeStruct((bpad, dim), out_dtype),
            grid_spec=pltpu.PrefetchScalarGridSpec(
                num_scalar_prefetch=0,
                grid=(bpad // tile_b, vpad // tile_v),
                in_specs=[
                    pl.BlockSpec((tile_b, nfeat), lambda i, k: (i, 0)),   # indices
                    pl.BlockSpec((tile_v, dim), lambda i, k: (k, 0)),     # table tile
                ],
                out_specs=pl.BlockSpec((tile_b, dim), lambda i, k: (i, 0)),
                scratch_shapes=[pltpu.VMEM((tile_b, dim), jnp.float32)],
            ),
            compiler_params=pltpu.CompilerParams(
                dimension_semantics=("parallel", "arbitrary"),
                vmem_limit_bytes=vmem_limit,
            ),
        )(gids_p, table_p)

    return out[:batch].reshape(*lead_shape, dim)


if __name__ == "__main__":
    root = jax.random.PRNGKey(0)
    key1, key2 = jax.random.split(root)

    def make_case(key, nvec, dim, lead):
        nvec = np.asarray(nvec, dtype=np.int64)
        nfeat = len(nvec)
        vocab = int(nvec.sum())
        # offset buffer: F.pad(cumsum(nvec[:-1]), [1, 0])
        offset = jnp.asarray(
            np.concatenate([[0], np.cumsum(nvec[:-1])]).astype(np.int32)
        )
        k_table, k_idx = jax.random.split(key)
        table = jax.random.normal(k_table, (vocab, dim), dtype=jnp.float32)
        cols = []
        for f in range(nfeat):
            k_idx, k_f = jax.random.split(k_idx)
            cols.append(
                jax.random.randint(k_f, lead + (1,), 0, int(nvec[f]), dtype=jnp.int32)
            )
        inputs = jnp.concatenate(cols, axis=-1)
        return inputs, table, offset

    # Case 1: small vocab (V=24, D=32, B=10) -> exercises the resident-table path.
    inputs1, table1, offset1 = make_case(key1, [5, 7, 3, 9], 32, (2, 5))
    out1 = jax.block_until_ready(multi_embedding_bag(inputs1, table1, offset1))
    ref1 = jnp.take(table1, offset1 + inputs1, axis=0).sum(axis=-2)
    assert out1.shape == ref1.shape
    assert jnp.allclose(out1, ref1, atol=1e-4, rtol=1e-5), "resident path mismatch"

    # Case 2: force the vocab-tiled accumulator path (V=611, tile_v=128 -> 5 vocab steps).
    inputs2, table2, offset2 = make_case(key2, [300, 200, 111], 48, (3, 7))
    out2 = jax.block_until_ready(
        multi_embedding_bag(inputs2, table2, offset2, tile_v=128, mode="tiled")
    )
    ref2 = jnp.take(table2, offset2 + inputs2, axis=0).sum(axis=-2)
    assert out2.shape == ref2.shape
    assert jnp.allclose(out2, ref2, atol=1e-4, rtol=1e-5), "tiled path mismatch"

    print("KERNEL_OK")
</pallas_src>

<mosaic_0001>
module attributes {stable_mosaic.version = 11 : i64} {
  func.func @_resident_kernel(%arg0: i32, %arg1: memref<16x4xi32, #tpu.memory_space<vmem>>, %arg2: memref<24x32xf32, #tpu.memory_space<vmem>>, %arg3: memref<16x32xf32, #tpu.memory_space<vmem>>) attributes {dimension_semantics = [#tpu.dimension_semantics<parallel>], iteration_bounds = array<i64: 1>, scalar_prefetch = 0 : i64, scratch_operands = 0 : i64, tpu.core_type = #tpu.core_type<tc>, window_params = [{transform_indices = @transform_0, window_bounds = array<i64: 16, 4>}, {pipeline_mode = #tpu.pipeline_mode<synchronous>, transform_indices = @transform_1, window_bounds = array<i64: 24, 32>}, {transform_indices = @transform_2, window_bounds = array<i64: 16, 32>}]} {
    %c0 = arith.constant 0 : index
    %c0_0 = arith.constant 0 : index
    %0 = vector.load %arg1[%c0, %c0_0] : memref<16x4xi32, #tpu.memory_space<vmem>>, vector<16x4xi32>
    %1 = tpu.iota {dimensions = array<i32: 1>} : vector<16x24xi32>
    %2 = vector.extract_strided_slice %0 {offsets = [0, 0], sizes = [16, 1], strides = [1, 1]} : vector<16x4xi32> to vector<16x1xi32>
    %3 = vector.broadcast %2 : vector<16x1xi32> to vector<16x24xi32>
    %4 = arith.cmpi eq, %3, %1 : vector<16x24xi32>
    %5 = vector.extract_strided_slice %0 {offsets = [0, 1], sizes = [16, 1], strides = [1, 1]} : vector<16x4xi32> to vector<16x1xi32>
    %6 = vector.broadcast %5 : vector<16x1xi32> to vector<16x24xi32>
    %7 = arith.cmpi eq, %6, %1 : vector<16x24xi32>
    %8 = arith.ori %4, %7 : vector<16x24xi1>
    %9 = vector.extract_strided_slice %0 {offsets = [0, 2], sizes = [16, 1], strides = [1, 1]} : vector<16x4xi32> to vector<16x1xi32>
    %10 = vector.broadcast %9 : vector<16x1xi32> to vector<16x24xi32>
    %11 = arith.cmpi eq, %10, %1 : vector<16x24xi32>
    %12 = arith.ori %8, %11 : vector<16x24xi1>
    %13 = vector.extract_strided_slice %0 {offsets = [0, 3], sizes = [16, 1], strides = [1, 1]} : vector<16x4xi32> to vector<16x1xi32>
    %14 = vector.broadcast %13 : vector<16x1xi32> to vector<16x24xi32>
    %15 = arith.cmpi eq, %14, %1 : vector<16x24xi32>
    %16 = arith.ori %12, %15 : vector<16x24xi1>
    %17 = arith.extui %16 : vector<16x24xi1> to vector<16x24xi32>
    %18 = arith.sitofp %17 : vector<16x24xi32> to vector<16x24xf32>
    %c0_1 = arith.constant 0 : index
    %c0_2 = arith.constant 0 : index
    %19 = vector.load %arg2[%c0_1, %c0_2] : memref<24x32xf32, #tpu.memory_space<vmem>>, vector<24x32xf32>
    %cst = arith.constant dense<0.000000e+00> : vector<16x32xf32>
    %20 = tpu.matmul %18, %19, %cst {dimension_numbers = #tpu.dot_dimension_numbers<[1], [0], [0], [1], [0, 0, 1, 1], [], []>} : vector<16x24xf32>, vector<24x32xf32>, vector<16x32xf32> -> vector<16x32xf32>
    %c0_3 = arith.constant 0 : index
    %c0_4 = arith.constant 0 : index
    %21 = vector.load %arg3[%c0_3, %c0_4] : memref<16x32xf32, #tpu.memory_space<vmem>>, vector<16x32xf32>
    tpu.vector_store %arg3[%c0_3, %c0_4], %20 {strides = array<i32>} : memref<16x32xf32, #tpu.memory_space<vmem>>, vector<16x32xf32>,
    return
  }
  func.func @transform_0(%arg0: i32) -> (i32, i32) {
    %c0_i32 = arith.constant 0 : i32
    %c0_i32_0 = arith.constant 0 : i32
    return %arg0, %c0_i32 : i32, i32
  }
  func.func @transform_1(%arg0: i32) -> (i32, i32) {
    %c0_i32 = arith.constant 0 : i32
    %c0_i32_0 = arith.constant 0 : i32
    %c0_i32_1 = arith.constant 0 : i32
    return %c0_i32, %c0_i32_0 : i32, i32
  }
  func.func @transform_2(%arg0: i32) -> (i32, i32) {
    %c0_i32 = arith.constant 0 : i32
    %c0_i32_0 = arith.constant 0 : i32
    return %arg0, %c0_i32 : i32, i32
  }
}

</mosaic_0001>

<llo_original>
// kernel: tpu_custom_call.1
$region0: #{tpu_custom_call.1}
  #allocation0 [shape = 'u32[]', space=smem, size = 0x4, offset = 0x4, fixed_abs, tag = 'smem constant byte address 0x4 - core index']
  #allocation1 [shape = 'u32[72,128]{1,0:T(1,128)}', space=vmem, size = 0x9000, scoped, tag = 'internal scratch']
  %s0 = inlined_call_operand.vmem [shape: s32[16,4], index: 0, kind: input, shape index: {}]
  %s1 = inlined_call_operand.hbm [shape: f32[24,32], index: 1, kind: input, shape index: {}]
  %s2 = inlined_call_operand.hbm [shape: f32[16,32], index: 2, kind: output, shape index: {}]
  %s3 = sld [smem:[#allocation0]]
  $region22: #{tpu_custom_call.1} parent=0
    _
  %s5 = ssub.s32 1, %s3
  %s6 = scalar_select 0, %s5, %s3
  $region1: #{tpu_custom_call.1} parent=0
    #allocation2 [shape = 'u8[12288]{0}', space=vmem, size = 0x3000, scoped, tag = 'input window, operand 1, single buffered']
    #allocation3 [shape = 's32[1]{0}', space=sflag, size = 0x4, scoped, tag = 'scoped memory for tpu_custom_call.1']
    #allocation4 [shape = 's32[1]{0}', space=sflag, size = 0x4, scoped, tag = 'scoped memory for tpu_custom_call.1']
    #allocation5 [shape = 'u8[8192]{0}', space=vmem, size = 0x2000, scoped, tag = 'output window, operand 0, single buffered']
    %7 = vsyncpa [#allocation3], 0
    %8 = vsyncpa [#allocation4], 0
    // Predicated region
    $region2: #{tpu_custom_call.1} parent=1 // pred_check
      _
    $region3: #{tpu_custom_call.1} parent=1 // pred_check_branch
      %10 = sbr.rel (0) target = $region5
    $region4: #{tpu_custom_call.1} parent=1 // pred_region
      _
    $region5: #{tpu_custom_call.1} parent=1 // pred_fallthru
      _
    // Predicated region
    $region6: #{tpu_custom_call.1} parent=1 // pred_check
      _
    $region7: #{tpu_custom_call.1} parent=1 // pred_check_branch
      %12 = sbr.rel (0) target = $region9
    $region8: #{tpu_custom_call.1} parent=1 // pred_region
      %14 = vsyncadd [#allocation3], 0
      %s15 = sshll.u32 %s1, 4
      %s16 = int_to_ptr.hbm [resolvable:$true] %s15
      %s17 = sshll.u32 [#allocation2], 4
      %s18 = int_to_ptr.vmem [resolvable:$true] %s17
      %23 = dma.hbm_to_vmem [thread:$0]  %s16, 384, %s18, [#allocation3], 128, 128, 8
    $region9: #{tpu_custom_call.1} parent=1 // pred_fallthru
      _
    // Predicated region
    $region10: #{tpu_custom_call.1} parent=1 // pred_check
      _
    $region11: #{tpu_custom_call.1} parent=1 // pred_check_branch
      %25 = sbr.rel (0) target = $region13
    $region12: #{tpu_custom_call.1} parent=1 // pred_region
      %27 = dma.done [#allocation3], 384
    $region13: #{tpu_custom_call.1} parent=1 // pred_fallthru
      _
    %v28 = vld [vmem:[%s0] sm:$0xff]
    %v29 = vld [vmem:[%s0 + $0x8] sm:$0xff]
    %v30 = vlaneseq
    %v31 = vand.u32 %v30, 127
    %32 = vset.pattern.permute.xlu0 0
    %33 = vperm.xlu0 %32, %v28
    %v34 = vpop.permute.xlu0 %33
    %35 = vset.pattern.permute.xlu0 0
    %36 = vperm.xlu0 %35, %v29
    %v37 = vpop.permute.xlu0 %36
    %vm38 = vcmp.eq.s32.totalorder %v34, %v31
    %vm39 = vcmp.eq.s32.totalorder %v37, %v31
    %40 = vset.pattern.permute.xlu0 1
    %41 = vperm.xlu0 %40, %v28
    %v42 = vpop.permute.xlu0 %41
    %43 = vset.pattern.permute.xlu0 1
    %44 = vperm.xlu0 %43, %v29
    %v45 = vpop.permute.xlu0 %44
    %vm46 = vcmp.eq.s32.totalorder %v42, %v31
    %vm47 = vcmp.eq.s32.totalorder %v45, %v31
    %vm48 = vmor %vm38, %vm46
    %vm49 = vmor %vm39, %vm47
    %50 = vset.pattern.permute.xlu0 2
    %51 = vperm.xlu0 %50, %v28
    %v52 = vpop.permute.xlu0 %51
    %53 = vset.pattern.permute.xlu0 2
    %54 = vperm.xlu0 %53, %v29
    %v55 = vpop.permute.xlu0 %54
    %vm56 = vcmp.eq.s32.totalorder %v52, %v31
    %vm57 = vcmp.eq.s32.totalorder %v55, %v31
    %vm58 = vmor %vm48, %vm56
    %vm59 = vmor %vm49, %vm57
    %60 = vset.pattern.permute.xlu0 3
    %61 = vperm.xlu0 %60, %v28
    %v62 = vpop.permute.xlu0 %61
    %63 = vset.pattern.permute.xlu0 3
    %64 = vperm.xlu0 %63, %v29
    %v65 = vpop.permute.xlu0 %64
    %vm66 = vcmp.eq.s32.totalorder %v62, %v31
    %vm67 = vcmp.eq.s32.totalorder %v65, %v31
    %vm68 = vmor %vm58, %vm66
    %vm69 = vmor %vm59, %vm67
    %v70 = vsel %vm68, 1, 0
    %v71 = vsel %vm69, 1, 0
    %v72 = vcvt.s32.f32 %v70
    %v73 = vcvt.s32.f32 %v71
    %v74 = vld [vmem:[#allocation2] sm:$0xff]
    %v75 = vld [vmem:[#allocation2 + $0x8] sm:$0xff]
    %v76 = vld [vmem:[#allocation2 + $0x10] sm:$0xff]
    %vm77 = vcmask 195584
    %v79 = vsel %vm77, %v72, 0
    %v82 = vsel %vm77, %v73, 0
    %84 = vmatpush.msra.mxu0 0.0
    %85 = vmatpush.msra.mxu0 0.0
    %86 = vmatpush.msra.mxu0 0.0
    %87 = vmatpush.msra.mxu0 0.0
    %88 = vmatpush.msra.mxu0 0.0
    %89 = vmatpush.msra.mxu0 0.0
    %90 = vmatpush.msra.mxu0 0.0
    %91 = vmatpush.msra.mxu0 0.0
    %92 = vmatpush.msra.mxu0 0.0
    %93 = vmatpush.msra.mxu0 0.0
    %94 = vmatpush.msra.mxu0 0.0
    %95 = vmatpush.msra.mxu0 0.0
    %96 = vmatpush.msra.mxu0 0.0
    %97 = vmatpush.msra.mxu0 %v76
    %98 = vmatpush.msra.mxu0 %v75
    %99 = vmatpush.msra.mxu0 %v74
    %100 = vmatmul.f32.gmra.mxu0 %v79
    %v101 = vpop.f32.mrf.mxu0
    %v102 = vadd.f32 0.0, %v101
    %103 = vmatmul.f32.gmra.mxu0 %v82
    %v104 = vpop.f32.mrf.mxu0
    %v105 = vadd.f32 0.0, %v104
    %106 = vdwg.mxu0
    %vm107 = vcmask 261120
    %108 = vst.msk [vmem:[#allocation5] sm:$0xff] %vm107, %v102
    %109 = vst.msk [vmem:[#allocation5 + $0x8] sm:$0xff] %vm107, %v105
    // Predicated region
    $region14: #{tpu_custom_call.1} parent=1 // pred_check
      _
    $region15: #{tpu_custom_call.1} parent=1 // pred_check_branch
      %111 = sbr.rel (0) target = $region17
    $region16: #{tpu_custom_call.1} parent=1 // pred_region
      %113 = vsyncadd [#allocation4], 0
      %s114 = sshll.u32 [#allocation5], 4
      %s115 = int_to_ptr.vmem [resolvable:$true] %s114
      %s116 = sshll.u32 %s2, 4
      %s117 = int_to_ptr.hbm [resolvable:$true] %s116
      %122 = dma.vmem_to_hbm [thread:$0]  %s115, 256, %s117, [#allocation4], 128, 128, 8
    $region17: #{tpu_custom_call.1} parent=1 // pred_fallthru
      _
    // Predicated region
    $region18: #{tpu_custom_call.1} parent=1 // pred_check
      _
    $region19: #{tpu_custom_call.1} parent=1 // pred_check_branch
      %124 = sbr.rel (0) target = $region21
    $region20: #{tpu_custom_call.1} parent=1 // pred_region
      %126 = dma.done [#allocation4], 256
    $region21: #{tpu_custom_call.1} parent=1 // pred_fallthru
      _
    %127 = vsyncpa [#allocation3], 1
    %128 = vsyncpa [#allocation4], 1

</llo_original>
